<compile_context>
chip_gen: v7x
topology: tpu7x:2x2x1
jax: 0.10.0
libtpu: 0.0.40
codegen_flags: <defaults>
</compile_context>

<pallas_src>
import functools

import jax
import jax.numpy as jnp
from jax.experimental import pallas as pl
from jax.experimental.pallas import tpu as pltpu

_LANE = 128


def _round_up(x, m):
    return ((x + m - 1) // m) * m


def _pick_tile(total, candidates):
    # `total` is always a multiple of the last candidate (128), so this never
    # falls back to a full-array block.
    for c in candidates:
        if total % c == 0:
            return c
    return candidates[-1]


# ----------------------------------------------------------------------------
# Kernel 1: SRF (1x1 conv across spectral bands) + clamp.
#   Normalization (1 / sum_c srf[m, c]) is folded into the weight in the wrapper.
# ----------------------------------------------------------------------------
def _srf_kernel(x_ref, w_ref, o_ref):
    # x_ref: [hs, tp]  (pixels on the lane axis)
    # w_ref: [ms, hs]  (pre-normalized)
    # o_ref: [ms, tp]  (lane-dense stores)
    y = jnp.dot(w_ref[...], x_ref[...], preferred_element_type=jnp.float32)
    o_ref[...] = jnp.clip(y, 0.0, 1.0).astype(o_ref.dtype)


def srf_apply(lr_hsi, srf):
    """lr_hsi: [B, hs, h, w] NCHW, srf: [ms, hs, 1, 1] -> [B, ms, h, w]."""
    B, hs, h, w = lr_hsi.shape
    ms = srf.shape[0]
    P = h * w

    # Fold per-output-band normalization into the weight (numerically exact).
    srf2d = srf[:, :, 0, 0]                                  # [ms, hs]
    wmat = srf2d / jnp.sum(srf2d, axis=1, keepdims=True)     # [ms, hs]

    # Native NCHW: keep pixels on the fast (lane) axis; this reshape is free.
    x = lr_hsi.reshape(B, hs, P)
    Pp = _round_up(P, _LANE)
    if Pp != P:
        x = jnp.pad(x, ((0, 0), (0, 0), (0, Pp - P)))        # zero cols -> clip(0)=0
    tp = _pick_tile(Pp, (8192, 4096, 2048, 1024, 512, 256, 128))

    grid = (B, Pp // tp)
    out = pl.pallas_call(
        _srf_kernel,
        out_shape=jax.ShapeDtypeStruct((B, ms, Pp), jnp.float32),
        grid=grid,
        in_specs=[
            pl.BlockSpec((None, hs, tp), lambda b, i: (b, 0, i)),
            pl.BlockSpec((ms, hs), lambda b, i: (0, 0)),
        ],
        out_specs=pl.BlockSpec((None, ms, tp), lambda b, i: (b, 0, i)),
        compiler_params=pltpu.CompilerParams(
            dimension_semantics=("parallel", "parallel")),
        cost_estimate=pl.CostEstimate(
            flops=2 * B * Pp * hs * ms,
            transcendentals=0,
            bytes_accessed=4 * (B * hs * Pp + B * ms * Pp + ms * hs)),
    )(x, wmat)

    if Pp != P:
        out = out[:, :, :P]
    return out.reshape(B, ms, h, w)


# ----------------------------------------------------------------------------
# Kernel 2: PSF blur + downsample (depthwise conv, stride=ratio, VALID) + clamp.
#   One channel image per grid step, read once from HBM. Row taps via strided
#   sublane reads; column taps + psf weights via a precomputed selection matmul.
# ----------------------------------------------------------------------------
def _make_psf_kernel(k, Ho, ratio):
    def kernel(x_ref, cmat_ref, o_ref):
        # x_ref: [H, W] one channel image; cmat_ref: [k, W, Wo]; o_ref: [Ho, Wo]
        acc = jnp.zeros(o_ref.shape, jnp.float32)
        for di in range(k):                       # k is small and static -> unrolled
            if ratio == 1:
                rows = x_ref[pl.ds(di, Ho), :]
            else:
                rows = x_ref[pl.ds(di, Ho, stride=ratio), :]   # strided sublane read
            acc = acc + jnp.dot(rows, cmat_ref[di],
                                preferred_element_type=jnp.float32)
        o_ref[...] = jnp.clip(acc, 0.0, 1.0).astype(o_ref.dtype)
    return kernel


def blur_down_apply(hr_msi, psf, ratio):
    """hr_msi: [B, ms, H, W] NCHW, psf: [1, 1, k, k] -> [B, ms, Ho, Wo]."""
    B, ms, H, W = hr_msi.shape
    k = psf.shape[-1]
    Ho = (H - k) // ratio + 1
    Wo = (W - k) // ratio + 1
    C = B * ms

    x = hr_msi.reshape(C, H, W)                  # free reshape, stays in NCHW order
    psf2d = psf[0, 0]                            # [k, k]

    # cmat[di, w, j] = psf[di, w - j*ratio] if 0 <= w - j*ratio < k else 0.
    # One MXU matmul per kernel row replaces the lane-strided gather / HBM im2col.
    wi = jnp.arange(W)[:, None]
    ji = jnp.arange(Wo)[None, :]
    dj = wi - ji * ratio                         # [W, Wo]
    valid = (dj >= 0) & (dj < k)
    djc = jnp.clip(dj, 0, k - 1)
    cmat = jnp.where(valid[None, :, :], psf2d[:, djc], 0.0).astype(jnp.float32)

    # TODO(synk): for very large H*W (whole image block > VMEM budget) add spatial
    # row-tiling with a (k - ratio) halo; whole-image-per-channel is fine for
    # typical hyperspectral scene sizes.
    kernel = _make_psf_kernel(k, Ho, ratio)
    out = pl.pallas_call(
        kernel,
        out_shape=jax.ShapeDtypeStruct((C, Ho, Wo), jnp.float32),
        grid=(C,),
        in_specs=[
            pl.BlockSpec((None, H, W), lambda c: (c, 0, 0)),
            pl.BlockSpec((k, W, Wo), lambda c: (0, 0, 0)),
        ],
        out_specs=pl.BlockSpec((None, Ho, Wo), lambda c: (c, 0, 0)),
        compiler_params=pltpu.CompilerParams(dimension_semantics=("parallel",)),
        cost_estimate=pl.CostEstimate(
            flops=2 * C * k * Ho * W * Wo,
            transcendentals=0,
            bytes_accessed=4 * (C * H * W + C * Ho * Wo + k * W * Wo)),
    )(x, cmat)

    return out.reshape(B, ms, Ho, Wo)


# ----------------------------------------------------------------------------
# BlindNet forward
# ----------------------------------------------------------------------------
def init_blindnet_params(hs_bands, ms_bands, ker_size):
    # Matches the PyTorch __init__ exactly (deterministic constants).
    psf = jnp.ones((1, 1, ker_size, ker_size), jnp.float32) * (1.0 / ker_size**2)
    srf = jnp.ones((ms_bands, hs_bands, 1, 1), jnp.float32) * (1.0 / hs_bands)
    return {"psf": psf, "srf": srf}


@functools.partial(jax.jit, static_argnames=("ratio",))
def blindnet_forward(params, lr_hsi, hr_msi, *, ratio):
    lr_msi_fhsi = srf_apply(lr_hsi, params["srf"])
    lr_msi_fmsi = blur_down_apply(hr_msi, params["psf"], ratio)
    return lr_msi_fhsi, lr_msi_fmsi


# ----------------------------------------------------------------------------
# Reference (plain JAX / XLA) for correctness checking
# ----------------------------------------------------------------------------
def blindnet_reference(params, lr_hsi, hr_msi, ratio):
    srf, psf = params["srf"], params["psf"]
    ms = srf.shape[0]
    srf2d = srf[:, :, 0, 0]                                   # [ms, hs]
    y1 = jnp.einsum("bchw,mc->bmhw", lr_hsi, srf2d)
    y1 = y1 / jnp.sum(srf2d, axis=1)[None, :, None, None]
    y1 = jnp.clip(y1, 0.0, 1.0)
    psf_full = jnp.tile(psf, (ms, 1, 1, 1))                   # depthwise
    y2 = jax.lax.conv_general_dilated(
        hr_msi, psf_full, window_strides=(ratio, ratio), padding="VALID",
        feature_group_count=ms)
    y2 = jnp.clip(y2, 0.0, 1.0)
    return y1, y2


if __name__ == "__main__":
    hs_bands, ms_bands, ker_size, ratio = 32, 4, 2, 2
    B, Hh, Wh = 2, 16, 16              # hr_msi spatial
    hl, wl = Hh // ratio, Wh // ratio  # lr_hsi spatial

    key = jax.random.PRNGKey(0)
    k1, k2 = jax.random.split(key)
    lr_hsi = jax.random.uniform(k1, (B, hs_bands, hl, wl), jnp.float32)
    hr_msi = jax.random.uniform(k2, (B, ms_bands, Hh, Wh), jnp.float32)

    params = init_blindnet_params(hs_bands, ms_bands, ker_size)

    out_fhsi, out_fmsi = blindnet_forward(params, lr_hsi, hr_msi, ratio=ratio)
    out_fhsi, out_fmsi = jax.block_until_ready((out_fhsi, out_fmsi))

    ref_fhsi, ref_fmsi = blindnet_reference(params, lr_hsi, hr_msi, ratio)
    assert out_fhsi.shape == (B, ms_bands, hl, wl), out_fhsi.shape
    assert out_fmsi.shape == (B, ms_bands, hl, wl), out_fmsi.shape
    assert jnp.max(jnp.abs(out_fhsi - ref_fhsi)) < 1e-5
    assert jnp.max(jnp.abs(out_fmsi - ref_fmsi)) < 1e-5

    print("KERNEL_OK")
</pallas_src>

<mosaic_0001>
module attributes {stable_mosaic.version = 11 : i64} {
  func.func @kernel(%arg0: i32, %arg1: memref<1x16x16xf32, #tpu.memory_space<vmem>>, %arg2: memref<2x16x8xf32, #tpu.memory_space<vmem>>, %arg3: memref<1x8x8xf32, #tpu.memory_space<vmem>>) attributes {dimension_semantics = [#tpu.dimension_semantics<parallel>], iteration_bounds = array<i64: 8>, scalar_prefetch = 0 : i64, scratch_operands = 0 : i64, tpu.core_type = #tpu.core_type<tc>, window_params = [{transform_indices = @transform_0, window_bounds = array<i64: 1, 16, 16>}, {pipeline_mode = #tpu.pipeline_mode<synchronous>, transform_indices = @transform_1, window_bounds = array<i64: 2, 16, 8>}, {transform_indices = @transform_2, window_bounds = array<i64: 1, 8, 8>}]} {
    %cst = arith.constant 0.000000e+00 : f32
    %0 = vector.broadcast %cst : f32 to vector<8x8xf32>
    %c0 = arith.constant 0 : index
    %c0_0 = arith.constant 0 : index
    %c0_1 = arith.constant 0 : index
    %1 = tpu.strided_load %arg1[%c0, %c0_0, %c0_1] {strides = array<i32: 1, 2, 1>} : memref<1x16x16xf32, #tpu.memory_space<vmem>>, vector<1x8x16xf32>
    %2 = vector.shape_cast %1 : vector<1x8x16xf32> to vector<8x16xf32>
    %c0_2 = arith.constant 0 : index
    %c0_3 = arith.constant 0 : index
    %c0_4 = arith.constant 0 : index
    %3 = vector.load %arg2[%c0_2, %c0_3, %c0_4] : memref<2x16x8xf32, #tpu.memory_space<vmem>>, vector<1x16x8xf32>
    %4 = vector.shape_cast %3 : vector<1x16x8xf32> to vector<16x8xf32>
    %cst_5 = arith.constant dense<0.000000e+00> : vector<8x8xf32>
    %5 = tpu.matmul %2, %4, %cst_5 {dimension_numbers = #tpu.dot_dimension_numbers<[1], [0], [0], [1], [0, 0, 1, 1], [], []>} : vector<8x16xf32>, vector<16x8xf32>, vector<8x8xf32> -> vector<8x8xf32>
    %6 = arith.addf %0, %5 : vector<8x8xf32>
    %c0_6 = arith.constant 0 : index
    %c1 = arith.constant 1 : index
    %c0_7 = arith.constant 0 : index
    %7 = tpu.strided_load %arg1[%c0_6, %c1, %c0_7] {strides = array<i32: 1, 2, 1>} : memref<1x16x16xf32, #tpu.memory_space<vmem>>, vector<1x8x16xf32>
    %8 = vector.shape_cast %7 : vector<1x8x16xf32> to vector<8x16xf32>
    %c1_8 = arith.constant 1 : index
    %c0_9 = arith.constant 0 : index
    %c0_10 = arith.constant 0 : index
    %9 = vector.load %arg2[%c1_8, %c0_9, %c0_10] : memref<2x16x8xf32, #tpu.memory_space<vmem>>, vector<1x16x8xf32>
    %10 = vector.shape_cast %9 : vector<1x16x8xf32> to vector<16x8xf32>
    %cst_11 = arith.constant dense<0.000000e+00> : vector<8x8xf32>
    %11 = tpu.matmul %8, %10, %cst_11 {dimension_numbers = #tpu.dot_dimension_numbers<[1], [0], [0], [1], [0, 0, 1, 1], [], []>} : vector<8x16xf32>, vector<16x8xf32>, vector<8x8xf32> -> vector<8x8xf32>
    %12 = arith.addf %6, %11 : vector<8x8xf32>
    %cst_12 = arith.constant 0.000000e+00 : f32
    %cst_13 = arith.constant 1.000000e+00 : f32
    %13 = vector.broadcast %cst_12 : f32 to vector<8x8xf32>
    %14 = arith.maximumf %13, %12 : vector<8x8xf32>
    %15 = vector.broadcast %cst_13 : f32 to vector<8x8xf32>
    %16 = arith.minimumf %15, %14 : vector<8x8xf32>
    %c0_14 = arith.constant 0 : index
    %c0_15 = arith.constant 0 : index
    %c0_16 = arith.constant 0 : index
    %17 = vector.load %arg3[%c0_14, %c0_15, %c0_16] : memref<1x8x8xf32, #tpu.memory_space<vmem>>, vector<1x8x8xf32>
    %18 = vector.shape_cast %17 : vector<1x8x8xf32> to vector<8x8xf32>
    %19 = vector.shape_cast %16 : vector<8x8xf32> to vector<1x8x8xf32>
    tpu.vector_store %arg3[%c0_14, %c0_15, %c0_16], %19 {strides = array<i32>} : memref<1x8x8xf32, #tpu.memory_space<vmem>>, vector<1x8x8xf32>,
    return
  }
  func.func @transform_0(%arg0: i32) -> (i32, i32, i32) {
    %c0_i32 = arith.constant 0 : i32
    %c0_i32_0 = arith.constant 0 : i32
    %c0_i32_1 = arith.constant 0 : i32
    return %arg0, %c0_i32, %c0_i32_0 : i32, i32, i32
  }
  func.func @transform_1(%arg0: i32) -> (i32, i32, i32) {
    %c0_i32 = arith.constant 0 : i32
    %c0_i32_0 = arith.constant 0 : i32
    %c0_i32_1 = arith.constant 0 : i32
    %c0_i32_2 = arith.constant 0 : i32
    return %c0_i32, %c0_i32_0, %c0_i32_1 : i32, i32, i32
  }
  func.func @transform_2(%arg0: i32) -> (i32, i32, i32) {
    %c0_i32 = arith.constant 0 : i32
    %c0_i32_0 = arith.constant 0 : i32
    %c0_i32_1 = arith.constant 0 : i32
    return %arg0, %c0_i32, %c0_i32_0 : i32, i32, i32
  }
}

module attributes {stable_mosaic.version = 11 : i64} {
  func.func @_srf_kernel(%arg0: i32, %arg1: i32, %arg2: memref<1x32x128xf32, #tpu.memory_space<vmem>>, %arg3: memref<4x32xf32, #tpu.memory_space<vmem>>, %arg4: memref<1x4x128xf32, #tpu.memory_space<vmem>>) attributes {dimension_semantics = [#tpu.dimension_semantics<parallel>, #tpu.dimension_semantics<parallel>], iteration_bounds = array<i64: 2, 1>, scalar_prefetch = 0 : i64, scratch_operands = 0 : i64, tpu.core_type = #tpu.core_type<tc>, window_params = [{transform_indices = @transform_0, window_bounds = array<i64: 1, 32, 128>}, {pipeline_mode = #tpu.pipeline_mode<synchronous>, transform_indices = @transform_1, window_bounds = array<i64: 4, 32>}, {transform_indices = @transform_2, window_bounds = array<i64: 1, 4, 128>}]} {
    %c0 = arith.constant 0 : index
    %c0_0 = arith.constant 0 : index
    %0 = vector.load %arg3[%c0, %c0_0] : memref<4x32xf32, #tpu.memory_space<vmem>>, vector<4x32xf32>
    %c0_1 = arith.constant 0 : index
    %c0_2 = arith.constant 0 : index
    %c0_3 = arith.constant 0 : index
    %1 = vector.load %arg2[%c0_1, %c0_2, %c0_3] : memref<1x32x128xf32, #tpu.memory_space<vmem>>, vector<1x32x128xf32>
    %2 = vector.shape_cast %1 : vector<1x32x128xf32> to vector<32x128xf32>
    %cst = arith.constant dense<0.000000e+00> : vector<4x128xf32>
    %3 = tpu.matmul %0, %2, %cst {dimension_numbers = #tpu.dot_dimension_numbers<[1], [0], [0], [1], [0, 0, 1, 1], [], []>} : vector<4x32xf32>, vector<32x128xf32>, vector<4x128xf32> -> vector<4x128xf32>
    %cst_4 = arith.constant 0.000000e+00 : f32
    %cst_5 = arith.constant 1.000000e+00 : f32
    %4 = vector.broadcast %cst_4 : f32 to vector<4x128xf32>
    %5 = arith.maximumf %4, %3 : vector<4x128xf32>
    %6 = vector.broadcast %cst_5 : f32 to vector<4x128xf32>
    %7 = arith.minimumf %6, %5 : vector<4x128xf32>
    %c0_6 = arith.constant 0 : index
    %c0_7 = arith.constant 0 : index
    %c0_8 = arith.constant 0 : index
    %8 = vector.load %arg4[%c0_6, %c0_7, %c0_8] : memref<1x4x128xf32, #tpu.memory_space<vmem>>, vector<1x4x128xf32>
    %9 = vector.shape_cast %8 : vector<1x4x128xf32> to vector<4x128xf32>
    %10 = vector.shape_cast %7 : vector<4x128xf32> to vector<1x4x128xf32>
    tpu.vector_store %arg4[%c0_6, %c0_7, %c0_8], %10 {strides = array<i32>} : memref<1x4x128xf32, #tpu.memory_space<vmem>>, vector<1x4x128xf32>,
    return
  }
  func.func @transform_0(%arg0: i32, %arg1: i32) -> (i32, i32, i32) {
    %c0_i32 = arith.constant 0 : i32
    %c0_i32_0 = arith.constant 0 : i32
    return %arg0, %c0_i32, %arg1 : i32, i32, i32
  }
  func.func @transform_1(%arg0: i32, %arg1: i32) -> (i32, i32) {
    %c0_i32 = arith.constant 0 : i32
    %c0_i32_0 = arith.constant 0 : i32
    %c0_i32_1 = arith.constant 0 : i32
    return %c0_i32, %c0_i32_0 : i32, i32
  }
  func.func @transform_2(%arg0: i32, %arg1: i32) -> (i32, i32, i32) {
    %c0_i32 = arith.constant 0 : i32
    %c0_i32_0 = arith.constant 0 : i32
    return %arg0, %c0_i32, %arg1 : i32, i32, i32
  }
}

</mosaic_0001>

<llo_original>
// kernel: blindnet_forward.2
$region0: #{blindnet_forward.2}
  #allocation0 [shape = 'u32[]', space=smem, size = 0x4, offset = 0x4, fixed_abs, tag = 'smem constant byte address 0x4 - core index']
  #allocation1 [shape = 'u32[144,128]{1,0:T(1,128)}', space=vmem, size = 0x12000, scoped, tag = 'internal scratch']
  %s0 = inlined_call_operand.vmem [shape: f32[2,32,128], index: 0, kind: input, shape index: {}]
  %s1 = inlined_call_operand.vmem [shape: f32[4,32], index: 1, kind: input, shape index: {}]
  %s2 = inlined_call_operand.vmem [shape: f32[2,4,128], index: 2, kind: output, shape index: {}]
  %s3 = sld [smem:[#allocation0]]
  $region41: #{blindnet_forward.2} parent=0
    _
  %s5 = ssub.s32 1, %s3
  %s6 = scalar_select 0, %s5, %s3
  loop: start=0, step=1, limit=4
  $region2: #{blindnet_forward.2} parent=0 // loop_pre_header
    _
  $region3: #{blindnet_forward.2} parent=0 // loop_header
    %s8 = sphi 0, %s12
    %p9 = scmp.ge.s32.totalorder %s8, 4
    %s15 = sphi 0, %s27
    %s16 = sphi 0, %s23
    %s17 = sphi 0, %s15
    %s18 = sphi 0, %s16
    %s19 = sphi 0, %s17
    %s20 = sphi 0, %s18
    %s32 = sphi 0, %s34
    %s35 = sphi 0, %s32
    %s36 = sphi 0, %s35
    %s52 = sphi 0, %s36
    %s56 = sphi 0, %s56
    %s58 = sphi 0, %s56
    %s59 = sphi 0, %s58
    %s73 = sphi 0, %s59
    %s81 = sphi 0, %s83
    %s84 = sphi 0, %s81
    %s85 = sphi 0, %s84
    %s101 = sphi 0, %s85
  $region4: #{blindnet_forward.2} parent=0 // loop_header_branch
    %11 = sbr.rel (%p9) target = $region8
  $region5: #{blindnet_forward.2} parent=0 // loop_body
    %s13 = ssub.s32 %s8, 1
    %s14 = ssub.s32 %s8, 2
    %s21 = sadd.s32 1, %s16
    %p22 = scmp.ge.s32.totalorder %s21, 1
    %s23 = scalar_select %p22, 0, %s21
    %s24 = sadd.s32 1, %s15
    %s25 = scalar_select %p22, %s24, %s15
    %p26 = scmp.ge.s32.totalorder %s25, 2
    %s27 = scalar_select %p26, 0, %s25
    %s28 = ssub.s32 %s15, %s27
    %s29 = ssub.s32 %s16, %s23
    %s30 = sor.u32 %s28, %s29
    %p31 = scmp.eq.s32.totalorder %s30, 0
    %s33 = sadd.s32 %s32, 1
    %s34 = scalar_select %p31, %s32, %s33
    %p37 = pneg %p31
    %p38 = scmp.eq.s32.totalorder %s8, 1
    %p39 = por %p37, %p38
    %p40 = scmp.ne.s32.totalorder %s32, %s35
    %p41 = scmp.eq.s32.totalorder %s8, 0
    %p42 = por %p40, %p41
    %p43 = scmp.ne.s32.totalorder %s32, %s35
    %p44 = scmp.eq.s32.totalorder %s13, 1
    %p45 = por %p43, %p44
    %p46 = scmp.ne.s32.totalorder %s35, %s36
    %p47 = scmp.eq.s32.totalorder %s13, 0
    %p48 = por %p46, %p47
    %p49 = scmp.ne.s32.totalorder %s35, %s36
    %p50 = scmp.eq.s32.totalorder %s14, 1
    %p51 = por %p49, %p50
    %p53 = scmp.ne.s32.totalorder %s36, %s52
    %p54 = scmp.eq.s32.totalorder %s14, 0
    %p55 = por %p53, %p54
    %s57 = sadd.s32 %s56, 1
    %p60 = scmp.eq.s32.totalorder %s8, 1
    %p61 = scmp.ne.s32.totalorder %s56, %s58
    %p62 = scmp.eq.s32.totalorder %s8, 0
    %p63 = por %p61, %p62
    %p64 = scmp.ne.s32.totalorder %s56, %s58
    %p65 = scmp.eq.s32.totalorder %s13, 1
    %p66 = por %p64, %p65
    %p67 = scmp.ne.s32.totalorder %s58, %s59
    %p68 = scmp.eq.s32.totalorder %s13, 0
    %p69 = por %p67, %p68
    %p70 = scmp.ne.s32.totalorder %s58, %s59
    %p71 = scmp.eq.s32.totalorder %s14, 1
    %p72 = por %p70, %p71
    %p74 = scmp.ne.s32.totalorder %s59, %s73
    %p75 = scmp.eq.s32.totalorder %s14, 0
    %p76 = por %p74, %p75
    %s77 = ssub.s32 %s15, %s27
    %s78 = ssub.s32 %s16, %s23
    %s79 = sor.u32 %s77, %s78
    %p80 = scmp.eq.s32.totalorder %s79, 0
    %s82 = sadd.s32 %s81, 1
    %s83 = scalar_select %p80, %s81, %s82
    %p86 = pneg %p80
    %p87 = scmp.eq.s32.totalorder %s8, 1
    %p88 = por %p86, %p87
    %p89 = scmp.ne.s32.totalorder %s81, %s84
    %p90 = scmp.eq.s32.totalorder %s8, 0
    %p91 = por %p89, %p90
    %p92 = scmp.ne.s32.totalorder %s81, %s84
    %p93 = scmp.eq.s32.totalorder %s13, 1
    %p94 = por %p92, %p93
    %p95 = scmp.ne.s32.totalorder %s84, %s85
    %p96 = scmp.eq.s32.totalorder %s13, 0
    %p97 = por %p95, %p96
    %p98 = scmp.ne.s32.totalorder %s84, %s85
    %p99 = scmp.eq.s32.totalorder %s14, 1
    %p100 = por %p98, %p99
    %p102 = scmp.ne.s32.totalorder %s85, %s101
    %p103 = scmp.eq.s32.totalorder %s14, 0
    %p104 = por %p102, %p103
    %p105 = scmp.le.s32.totalorder 1, %s8
    %p106 = scmp.lt.s32.totalorder %s8, 3
    %p107 = pnand %p105, %p106
    %p108 = pneg %p107
    // Predicated region
    $region9: #{blindnet_forward.2} parent=5 // pred_check
      _
    $region10: #{blindnet_forward.2} parent=5 // pred_check_branch
      %110 = sbr.rel (%p107) target = $region12
    $region11: #{blindnet_forward.2} parent=5 // pred_region
      %s111 = ssub.s32 %s8, 1
      // Predicated region
      $region13: #{blindnet_forward.2} parent=11 // pred_check
        %p112 = pneg %p69
      $region14: #{blindnet_forward.2} parent=11 // pred_check_branch
        %114 = sbr.rel (%p112) target = $region16
      $region15: #{blindnet_forward.2} parent=11 // pred_region
        _
      $region16: #{blindnet_forward.2} parent=11 // pred_fallthru
        _
    $region12: #{blindnet_forward.2} parent=5 // pred_fallthru
      _
    %p115 = scmp.lt.s32.totalorder %s8, 2
    // Predicated region
    $region17: #{blindnet_forward.2} parent=5 // pred_check
      %p116 = pneg %p115
    $region18: #{blindnet_forward.2} parent=5 // pred_check_branch
      %118 = sbr.rel (%p116) target = $region20
    $region19: #{blindnet_forward.2} parent=5 // pred_region
      // Predicated region
      $region21: #{blindnet_forward.2} parent=19 // pred_check
        %p119 = pneg %p42
      $region22: #{blindnet_forward.2} parent=19 // pred_check_branch
        %121 = sbr.rel (%p119) target = $region24
      $region23: #{blindnet_forward.2} parent=19 // pred_region
        %p122 = scmp.lt.s32.totalorder %s15, 1
        %s123 = scalar_select %p122, %s15, 1
        %p124 = scmp.lt.s32.totalorder %s16, 0
        %s125 = scalar_select %p124, %s16, 0
        %s126 = smul.addr %s123, 4
        %s127 = sadd.s32 %s125, %s126
        %s128 = smul.addr %s127, 8
        %s129 = scalar_lea.vmem %s0, %s128
      $region24: #{blindnet_forward.2} parent=19 // pred_fallthru
        _
    $region20: #{blindnet_forward.2} parent=5 // pred_fallthru
      _
    %p130 = scmp.le.s32.totalorder 1, %s8
    %p131 = scmp.lt.s32.totalorder %s8, 3
    %p132 = pnand %p130, %p131
    %p133 = pneg %p132
    // Predicated region
    $region25: #{blindnet_forward.2} parent=5 // pred_check
      _
    $region26: #{blindnet_forward.2} parent=5 // pred_check_branch
      %135 = sbr.rel (%p132) target = $region28
    $region27: #{blindnet_forward.2} parent=5 // pred_region
      %s136 = ssub.s32 %s8, 1
      %p137 = scmp.lt.s32.totalorder %s17, 1
      %s138 = scalar_select %p137, %s17, 1
      %p139 = scmp.lt.s32.totalorder %s18, 0
      %s140 = scalar_select %p139, %s18, 0
      %s141 = smul.addr %s138, 4
      %s142 = sadd.s32 %s140, %s141
      %s143 = smul.addr %s142, 8
      %s144 = scalar_lea.vmem %s0, %s143
      %p145 = pneg %p48
      %p146 = pneg %p45
      %p147 = pneg %p69
      %p148 = pneg %p66
      %p149 = pneg %p97
      %p150 = pneg %p94
      %p151 = scmp.lt.s32.totalorder %s17, 1
      %s152 = scalar_select %p151, %s17, 1
      %p153 = scmp.lt.s32.totalorder %s18, 0
      %s154 = scalar_select %p153, %s18, 0
      %s155 = sadd.s32 %s154, %s152
      %s156 = smul.addr %s155, 4
      %s157 = scalar_lea.vmem %s2, %s156
      %p158 = scmp.lt.s32.totalorder %s17, 1
      %s159 = scalar_select %p158, %s17, 1
      %p160 = scmp.lt.s32.totalorder %s18, 0
      %s161 = scalar_select %p160, %s18, 0
      %s162 = smul.addr %s159, 4
      %s163 = sadd.s32 %s161, %s162
      %s164 = smul.addr %s163, 8
      %s165 = scalar_lea.vmem %s0, %s164
      %p166 = scmp.lt.s32.totalorder %s17, 1
      %s167 = scalar_select %p166, %s17, 1
      %p168 = scmp.lt.s32.totalorder %s18, 0
      %s169 = scalar_select %p168, %s18, 0
      %s170 = sadd.s32 %s169, %s167
      %s171 = smul.addr %s170, 4
      %s172 = scalar_lea.vmem %s2, %s171
      %v173 = vld [vmem:[%s1] sm:$0xf]
      %v174 = vld [vmem:[%s165] sm:$0xff]
      %v175 = vld [vmem:[%s165 + $0x8] sm:$0xff]
      %v176 = vld [vmem:[%s165 + $0x10] sm:$0xff]
      %v177 = vld [vmem:[%s165 + $0x18] sm:$0xff]
      %vm178 = vcmask 261120
      %v180 = vsel %vm178, %v173, 0
      %182 = vmatprep.subr.mxu0 0.0
      %183 = vmatpush1.msra.mxu0 %v174
      %184 = vmatprep.subr.mxu0 0.0
      %185 = vmatpush1.msra.mxu0 %v175
      %186 = vmatprep.subr.mxu0 0.0
      %187 = vmatpush1.msra.mxu0 %v176
      %188 = vmatprep.subr.mxu0 0.0
      %189 = vmatpush1.msra.mxu0 %v177
      %190 = vmatprep.subr.mxu0 0.0
      %191 = vmatpush1.msra.mxu0 0.0
      %192 = vmatprep.subr.mxu0 0.0
      %193 = vmatpush1.msra.mxu0 0.0
      %194 = vmatprep.subr.mxu0 0.0
      %195 = vmatpush1.msra.mxu0 0.0
      %196 = vmatprep.subr.mxu0 0.0
      %197 = vmatpush1.msra.mxu0 0.0
      %198 = vmatprep.subr.mxu0 0.0
      %199 = vmatpush1.msra.mxu0 0.0
      %200 = vmatprep.subr.mxu0 0.0
      %201 = vmatpush1.msra.mxu0 0.0
      %202 = vmatprep.subr.mxu0 0.0
      %203 = vmatpush1.msra.mxu0 0.0
      %204 = vmatprep.subr.mxu0 0.0
      %205 = vmatpush1.msra.mxu0 0.0
      %206 = vmatprep.subr.mxu0 0.0
      %207 = vmatpush1.msra.mxu0 0.0
      %208 = vmatprep.subr.mxu0 0.0
      %209 = vmatpush1.msra.mxu0 0.0
      %210 = vmatprep.subr.mxu0 0.0
      %211 = vmatpush1.msra.mxu0 0.0
      %212 = vmatprep.subr.mxu0 0.0
      %213 = vmatpush1.msra.mxu0 0.0
      %214 = vmatprep.subr.mxu0 0.0
      %215 = vmatpush1.msra.mxu0 0.0
      %216 = vmatprep.subr.mxu0 0.0
      %217 = vmatpush1.msra.mxu0 0.0
      %218 = vmatprep.subr.mxu0 0.0
      %219 = vmatpush1.msra.mxu0 0.0
      %220 = vmatprep.subr.mxu0 0.0
      %221 = vmatpush1.msra.mxu0 0.0
      %222 = vmatprep.subr.mxu0 0.0
      %223 = vmatpush1.msra.mxu0 0.0
      %224 = vmatprep.subr.mxu0 0.0
      %225 = vmatpush1.msra.mxu0 0.0
      %226 = vmatprep.subr.mxu0 0.0
      %227 = vmatpush1.msra.mxu0 0.0
      %228 = vmatprep.subr.mxu0 0.0
      %229 = vmatpush1.msra.mxu0 0.0
      %230 = vmatprep.subr.mxu0 0.0
      %231 = vmatpush1.msra.mxu0 0.0
      %232 = vmatprep.subr.mxu0 0.0
      %233 = vmatpush1.msra.mxu0 0.0
      %234 = vmatprep.subr.mxu0 0.0
      %235 = vmatpush1.msra.mxu0 0.0
      %236 = vmatprep.subr.mxu0 0.0
      %237 = vmatpush1.msra.mxu0 0.0
      %238 = vmatprep.subr.mxu0 0.0
      %239 = vmatpush1.msra.mxu0 0.0
      %240 = vmatprep.subr.mxu0 0.0
      %241 = vmatpush1.msra.mxu0 0.0
      %242 = vmatprep.subr.mxu0 0.0
      %243 = vmatpush1.msra.mxu0 0.0
      %244 = vmatprep.subr.mxu0 0.0
      %245 = vmatpush1.msra.mxu0 0.0
      %246 = vmatprep.mubr.f32.mxu0 0.0
      %247 = vmatmul.mubr.f32.gmra.mrb[0].mxu0 %v180
      %v248 = vpop.f32.mrb[0].mxu0
      %v249 = vadd.f32 0.0, %v248
      %v250 = vpop.f32.mrb[0].mxu0
      %251 = vdwg.mxu0
      %v252 = vmax.f32 %v249, 0.0
      %v253 = vmin.f32 %v252, 1.0
      %254 = vst [vmem:[%s172] sm:$0xf] %v253
      %p255 = scmp.lt.s32.totalorder %s17, 1
      %s256 = scalar_select %p255, %s17, 1
      %p257 = scmp.lt.s32.totalorder %s18, 0
      %s258 = scalar_select %p257, %s18, 0
      %s259 = sadd.s32 %s258, %s256
      %s260 = smul.addr %s259, 4
      %s261 = scalar_lea.vmem %s2, %s260
      // Predicated region
      $region29: #{blindnet_forward.2} parent=27 // pred_check
        %p262 = pneg %p94
      $region30: #{blindnet_forward.2} parent=27 // pred_check_branch
        %264 = sbr.rel (%p262) target = $region32
      $region31: #{blindnet_forward.2} parent=27 // pred_region
        _
      $region32: #{blindnet_forward.2} parent=27 // pred_fallthru
        _
    $region28: #{blindnet_forward.2} parent=5 // pred_fallthru
      _
    %p265 = scmp.le.s32.totalorder 2, %s8
    // Predicated region
    $region33: #{blindnet_forward.2} parent=5 // pred_check
      %p266 = pneg %p265
    $region34: #{blindnet_forward.2} parent=5 // pred_check_branch
      %268 = sbr.rel (%p266) target = $region36
    $region35: #{blindnet_forward.2} parent=5 // pred_region
      %s269 = ssub.s32 %s8, 2
      // Predicated region
      $region37: #{blindnet_forward.2} parent=35 // pred_check
        %p270 = pneg %p100
      $region38: #{blindnet_forward.2} parent=35 // pred_check_branch
        %272 = sbr.rel (%p270) target = $region40
      $region39: #{blindnet_forward.2} parent=35 // pred_region
        %p273 = scmp.lt.s32.totalorder %s19, 1
        %s274 = scalar_select %p273, %s19, 1
        %p275 = scmp.lt.s32.totalorder %s20, 0
        %s276 = scalar_select %p275, %s20, 0
        %s277 = sadd.s32 %s276, %s274
        %s278 = smul.addr %s277, 4
        %s279 = scalar_lea.vmem %s2, %s278
      $region40: #{blindnet_forward.2} parent=35 // pred_fallthru
        _
    $region36: #{blindnet_forward.2} parent=5 // pred_fallthru
      _
  $region6: #{blindnet_forward.2} parent=0 // loop_footer
    %s12 = sadd.s32 1, %s8
  $region7: #{blindnet_forward.2} parent=0 // loop_footer_branch
    %7 = sbr.rel target = $region3
  $region8: #{blindnet_forward.2} parent=0 // loop_exit
    _

// kernel: blindnet_forward.3
$region0: #{blindnet_forward.3}
  #allocation0 [shape = 'u32[]', space=smem, size = 0x4, offset = 0x4, fixed_abs, tag = 'smem constant byte address 0x4 - core index']
  #allocation1 [shape = 'u32[144,128]{1,0:T(1,128)}', space=vmem, size = 0x12000, scoped, tag = 'internal scratch']
  %s0 = inlined_call_operand.vmem [shape: f32[8,16,16], index: 0, kind: input, shape index: {}]
  %s1 = inlined_call_operand.vmem [shape: f32[2,16,8], index: 1, kind: input, shape index: {}]
  %s2 = inlined_call_operand.hbm [shape: f32[8,8,8], index: 2, kind: output, shape index: {}]
  %s3 = sld [smem:[#allocation0]]
  $region41: #{blindnet_forward.3} parent=0
    _
  %s5 = ssub.s32 1, %s3
  %s6 = scalar_select 0, %s5, %s3
  $region1: #{blindnet_forward.3} parent=0
    #allocation2 [shape = 'u8[8192]{0}', space=vmem, size = 0x2000, scoped, tag = 'output window, operand 0']
    #allocation3 [shape = 's32[2]{0}', space=sflag, size = 0x8, scoped, tag = 'scoped memory for blindnet_forward.3']
    %7 = vsyncpa [#allocation3], 0
    %s8 = scalar_lea.sflag [#allocation3], 1
    %9 = vsyncpa %s8, 0
    loop: start=0, step=1, limit=10
    $region2: #{blindnet_forward.3} parent=1 // loop_pre_header
      _
    $region3: #{blindnet_forward.3} parent=1 // loop_header
      %s11 = sphi 0, %s15
      %p12 = scmp.ge.s32.totalorder %s11, 10
      %s21 = sphi 0, %s23
      %s24 = sphi 0, %s21
      %s25 = sphi 0, %s24
      %s41 = sphi 0, %s25
      %s45 = sphi 0, %s45
      %s47 = sphi 0, %s45
      %s48 = sphi 0, %s47
      %s62 = sphi 0, %s48
      %s68 = sphi 0, %s70
      %s71 = sphi 0, %s68
      %s72 = sphi 0, %s71
      %s88 = sphi 0, %s72
    $region4: #{blindnet_forward.3} parent=1 // loop_header_branch
      %14 = sbr.rel (%p12) target = $region8
    $region5: #{blindnet_forward.3} parent=1 // loop_body
      %s16 = ssub.s32 %s11, 1
      %s17 = ssub.s32 %s11, 2
      %s18 = sadd.s32 %s11, 1
      %s19 = ssub.s32 %s11, %s18
      %p20 = scmp.eq.s32.totalorder %s19, 0
      %s22 = sadd.s32 %s21, 1
      %s23 = scalar_select %p20, %s21, %s22
      %p26 = pneg %p20
      %p27 = scmp.eq.s32.totalorder %s11, 7
      %p28 = por %p26, %p27
      %p29 = scmp.ne.s32.totalorder %s21, %s24
      %p30 = scmp.eq.s32.totalorder %s11, 0
      %p31 = por %p29, %p30
      %p32 = scmp.ne.s32.totalorder %s21, %s24
      %p33 = scmp.eq.s32.totalorder %s16, 7
      %p34 = por %p32, %p33
      %p35 = scmp.ne.s32.totalorder %s24, %s25
      %p36 = scmp.eq.s32.totalorder %s16, 0
      %p37 = por %p35, %p36
      %p38 = scmp.ne.s32.totalorder %s24, %s25
      %p39 = scmp.eq.s32.totalorder %s17, 7
      %p40 = por %p38, %p39
      %p42 = scmp.ne.s32.totalorder %s25, %s41
      %p43 = scmp.eq.s32.totalorder %s17, 0
      %p44 = por %p42, %p43
      %s46 = sadd.s32 %s45, 1
      %p49 = scmp.eq.s32.totalorder %s11, 7
      %p50 = scmp.ne.s32.totalorder %s45, %s47
      %p51 = scmp.eq.s32.totalorder %s11, 0
      %p52 = por %p50, %p51
      %p53 = scmp.ne.s32.totalorder %s45, %s47
      %p54 = scmp.eq.s32.totalorder %s16, 7
      %p55 = por %p53, %p54
      %p56 = scmp.ne.s32.totalorder %s47, %s48
      %p57 = scmp.eq.s32.totalorder %s16, 0
      %p58 = por %p56, %p57
      %p59 = scmp.ne.s32.totalorder %s47, %s48
      %p60 = scmp.eq.s32.totalorder %s17, 7
      %p61 = por %p59, %p60
      %p63 = scmp.ne.s32.totalorder %s48, %s62
      %p64 = scmp.eq.s32.totalorder %s17, 0
      %p65 = por %p63, %p64
      %s66 = ssub.s32 %s11, %s18
      %p67 = scmp.eq.s32.totalorder %s66, 0
      %s69 = sadd.s32 %s68, 1
      %s70 = scalar_select %p67, %s68, %s69
      %p73 = pneg %p67
      %p74 = scmp.eq.s32.totalorder %s11, 7
      %p75 = por %p73, %p74
      %p76 = scmp.ne.s32.totalorder %s68, %s71
      %p77 = scmp.eq.s32.totalorder %s11, 0
      %p78 = por %p76, %p77
      %p79 = scmp.ne.s32.totalorder %s68, %s71
      %p80 = scmp.eq.s32.totalorder %s16, 7
      %p81 = por %p79, %p80
      %p82 = scmp.ne.s32.totalorder %s71, %s72
      %p83 = scmp.eq.s32.totalorder %s16, 0
      %p84 = por %p82, %p83
      %p85 = scmp.ne.s32.totalorder %s71, %s72
      %p86 = scmp.eq.s32.totalorder %s17, 7
      %p87 = por %p85, %p86
      %p89 = scmp.ne.s32.totalorder %s72, %s88
      %p90 = scmp.eq.s32.totalorder %s17, 0
      %p91 = por %p89, %p90
      %p92 = scmp.le.s32.totalorder 1, %s11
      %p93 = scmp.lt.s32.totalorder %s11, 9
      %p94 = pnand %p92, %p93
      %p95 = pneg %p94
      // Predicated region
      $region9: #{blindnet_forward.3} parent=5 // pred_check
        _
      $region10: #{blindnet_forward.3} parent=5 // pred_check_branch
        %97 = sbr.rel (%p94) target = $region12
      $region11: #{blindnet_forward.3} parent=5 // pred_region
        %s98 = ssub.s32 %s11, 1
        // Predicated region
        $region13: #{blindnet_forward.3} parent=11 // pred_check
          %p99 = pneg %p58
        $region14: #{blindnet_forward.3} parent=11 // pred_check_branch
          %101 = sbr.rel (%p99) target = $region16
        $region15: #{blindnet_forward.3} parent=11 // pred_region
          _
        $region16: #{blindnet_forward.3} parent=11 // pred_fallthru
          _
      $region12: #{blindnet_forward.3} parent=5 // pred_fallthru
        _
      %p102 = scmp.lt.s32.totalorder %s11, 8
      // Predicated region
      $region17: #{blindnet_forward.3} parent=5 // pred_check
        %p103 = pneg %p102
      $region18: #{blindnet_forward.3} parent=5 // pred_check_branch
        %105 = sbr.rel (%p103) target = $region20
      $region19: #{blindnet_forward.3} parent=5 // pred_region
        // Predicated region
        $region21: #{blindnet_forward.3} parent=19 // pred_check
          %p106 = pneg %p31
        $region22: #{blindnet_forward.3} parent=19 // pred_check_branch
          %108 = sbr.rel (%p106) target = $region24
        $region23: #{blindnet_forward.3} parent=19 // pred_region
          %p109 = scmp.lt.s32.totalorder %s11, 7
          %s110 = scalar_select %p109, %s11, 7
          %s111 = smul.addr %s110, 2
          %s112 = smul.addr %s111, 8
          %s113 = scalar_lea.vmem %s0, %s112
        $region24: #{blindnet_forward.3} parent=19 // pred_fallthru
          _
      $region20: #{blindnet_forward.3} parent=5 // pred_fallthru
        _
      %p114 = scmp.le.s32.totalorder 1, %s11
      %p115 = scmp.lt.s32.totalorder %s11, 9
      %p116 = pnand %p114, %p115
      %p117 = pneg %p116
      // Predicated region
      $region25: #{blindnet_forward.3} parent=5 // pred_check
        _
      $region26: #{blindnet_forward.3} parent=5 // pred_check_branch
        %119 = sbr.rel (%p116) target = $region28
      $region27: #{blindnet_forward.3} parent=5 // pred_region
        %s120 = ssub.s32 %s11, 1
        %p121 = scmp.lt.s32.totalorder %s16, 7
        %s122 = scalar_select %p121, %s16, 7
        %s123 = smul.addr %s122, 2
        %s124 = smul.addr %s123, 8
        %s125 = scalar_lea.vmem %s0, %s124
        %p126 = pneg %p37
        %p127 = pneg %p34
        %p128 = pneg %p58
        %p129 = pneg %p55
        %p130 = pneg %p84
        %p131 = pneg %p81
        %s132 = sand.u32 %s71, 1
        %s133 = scalar_lea.sflag [#allocation3], %s132
        %s134 = sand.u32 %s71, 1
        %s135 = smul.addr %s134, 8
        %s136 = scalar_lea.vmem [#allocation2], %s135
        %p137 = scmp.lt.s32.totalorder %s16, 7
        %s138 = scalar_select %p137, %s16, 7
        %s139 = smul.addr %s138, 2
        %s140 = smul.addr %s139, 8
        %s141 = scalar_lea.vmem %s0, %s140
        %v142 = vld [vmem:[%s141] ss:$2 sm:$0xff]
        %v143 = vld [vmem:[%s1] sm:$0xff]
        %v144 = vld [vmem:[%s1 + $0x8] sm:$0xff]
        %s145 = scalar_lea.vmem %s141, 1
        %v146 = vld [vmem:[%s145] ss:$2 sm:$0xff]
        %s147 = scalar_lea.vmem %s1, 16
        %v148 = vld [vmem:[%s147] sm:$0xff]
        %v149 = vld [vmem:[%s147 + $0x8] sm:$0xff]
        %vm150 = vcmask 130048
        %v152 = vsel %vm150, %v146, 0
        %154 = vmatprep.subr.mxu0 0.0
        %155 = vmatpush1.msra.mxu0 %v148
        %156 = vmatprep.subr.mxu0 0.0
        %157 = vmatpush1.msra.mxu0 %v149
        %158 = vmatprep.subr.mxu0 0.0
        %159 = vmatpush1.msra.mxu0 0.0
        %160 = vmatprep.subr.mxu0 0.0
        %161 = vmatpush1.msra.mxu0 0.0
        %162 = vmatprep.subr.mxu0 0.0
        %163 = vmatpush1.msra.mxu0 0.0
        %164 = vmatprep.subr.mxu0 0.0
        %165 = vmatpush1.msra.mxu0 0.0
        %166 = vmatprep.subr.mxu0 0.0
        %167 = vmatpush1.msra.mxu0 0.0
        %168 = vmatprep.subr.mxu0 0.0
        %169 = vmatpush1.msra.mxu0 0.0
        %170 = vmatprep.subr.mxu0 0.0
        %171 = vmatpush1.msra.mxu0 0.0
        %172 = vmatprep.subr.mxu0 0.0
        %173 = vmatpush1.msra.mxu0 0.0
        %174 = vmatprep.subr.mxu0 0.0
        %175 = vmatpush1.msra.mxu0 0.0
        %176 = vmatprep.subr.mxu0 0.0
        %177 = vmatpush1.msra.mxu0 0.0
        %178 = vmatprep.subr.mxu0 0.0
        %179 = vmatpush1.msra.mxu0 0.0
        %180 = vmatprep.subr.mxu0 0.0
        %181 = vmatpush1.msra.mxu0 0.0
        %182 = vmatprep.subr.mxu0 0.0
        %183 = vmatpush1.msra.mxu0 0.0
        %184 = vmatprep.subr.mxu0 0.0
        %185 = vmatpush1.msra.mxu0 0.0
        %186 = vmatprep.subr.mxu0 0.0
        %187 = vmatpush1.msra.mxu0 0.0
        %188 = vmatprep.subr.mxu0 0.0
        %189 = vmatpush1.msra.mxu0 0.0
        %190 = vmatprep.subr.mxu0 0.0
        %191 = vmatpush1.msra.mxu0 0.0
        %192 = vmatprep.subr.mxu0 0.0
        %193 = vmatpush1.msra.mxu0 0.0
        %194 = vmatprep.subr.mxu0 0.0
        %195 = vmatpush1.msra.mxu0 0.0
        %196 = vmatprep.subr.mxu0 0.0
        %197 = vmatpush1.msra.mxu0 0.0
        %198 = vmatprep.subr.mxu0 0.0
        %199 = vmatpush1.msra.mxu0 0.0
        %200 = vmatprep.subr.mxu0 0.0
        %201 = vmatpush1.msra.mxu0 0.0
        %202 = vmatprep.subr.mxu0 0.0
        %203 = vmatpush1.msra.mxu0 0.0
        %204 = vmatprep.subr.mxu0 0.0
        %205 = vmatpush1.msra.mxu0 0.0
        %206 = vmatprep.subr.mxu0 0.0
        %207 = vmatpush1.msra.mxu0 0.0
        %208 = vmatprep.subr.mxu0 0.0
        %209 = vmatpush1.msra.mxu0 0.0
        %210 = vmatprep.subr.mxu0 0.0
        %211 = vmatpush1.msra.mxu0 0.0
        %212 = vmatprep.subr.mxu0 0.0
        %213 = vmatpush1.msra.mxu0 0.0
        %214 = vmatprep.subr.mxu0 0.0
        %215 = vmatpush1.msra.mxu0 0.0
        %216 = vmatprep.subr.mxu0 0.0
        %217 = vmatpush1.msra.mxu0 0.0
        %218 = vmatprep.mubr.f32.mxu0 0.0
        %219 = vmatmul.mubr.f32.gmra.mrb[0].mxu0 %v152
        %v220 = vpop.f32.mrb[0].mxu0
        %v221 = vadd.f32 0.0, %v220
        %v222 = vpop.f32.mrb[0].mxu0
        %223 = vdwg.mxu0
        %v225 = vsel %vm150, %v142, 0
        %227 = vmatprep.subr.mxu0 0.0
        %228 = vmatpush1.msra.mxu0 %v143
        %229 = vmatprep.subr.mxu0 0.0
        %230 = vmatpush1.msra.mxu0 %v144
        %231 = vmatprep.subr.mxu0 0.0
        %232 = vmatpush1.msra.mxu0 0.0
        %233 = vmatprep.subr.mxu0 0.0
        %234 = vmatpush1.msra.mxu0 0.0
        %235 = vmatprep.subr.mxu0 0.0
        %236 = vmatpush1.msra.mxu0 0.0
        %237 = vmatprep.subr.mxu0 0.0
        %238 = vmatpush1.msra.mxu0 0.0
        %239 = vmatprep.subr.mxu0 0.0
        %240 = vmatpush1.msra.mxu0 0.0
        %241 = vmatprep.subr.mxu0 0.0
        %242 = vmatpush1.msra.mxu0 0.0
        %243 = vmatprep.subr.mxu0 0.0
        %244 = vmatpush1.msra.mxu0 0.0
        %245 = vmatprep.subr.mxu0 0.0
        %246 = vmatpush1.msra.mxu0 0.0
        %247 = vmatprep.subr.mxu0 0.0
        %248 = vmatpush1.msra.mxu0 0.0
        %249 = vmatprep.subr.mxu0 0.0
        %250 = vmatpush1.msra.mxu0 0.0
        %251 = vmatprep.subr.mxu0 0.0
        %252 = vmatpush1.msra.mxu0 0.0
        %253 = vmatprep.subr.mxu0 0.0
        %254 = vmatpush1.msra.mxu0 0.0
        %255 = vmatprep.subr.mxu0 0.0
        %256 = vmatpush1.msra.mxu0 0.0
        %257 = vmatprep.subr.mxu0 0.0
        %258 = vmatpush1.msra.mxu0 0.0
        %259 = vmatprep.subr.mxu0 0.0
        %260 = vmatpush1.msra.mxu0 0.0
        %261 = vmatprep.subr.mxu0 0.0
        %262 = vmatpush1.msra.mxu0 0.0
        %263 = vmatprep.subr.mxu0 0.0
        %264 = vmatpush1.msra.mxu0 0.0
        %265 = vmatprep.subr.mxu0 0.0
        %266 = vmatpush1.msra.mxu0 0.0
        %267 = vmatprep.subr.mxu0 0.0
        %268 = vmatpush1.msra.mxu0 0.0
        %269 = vmatprep.subr.mxu0 0.0
        %270 = vmatpush1.msra.mxu0 0.0
        %271 = vmatprep.subr.mxu0 0.0
        %272 = vmatpush1.msra.mxu0 0.0
        %273 = vmatprep.subr.mxu0 0.0
        %274 = vmatpush1.msra.mxu0 0.0
        %275 = vmatprep.subr.mxu0 0.0
        %276 = vmatpush1.msra.mxu0 0.0
        %277 = vmatprep.subr.mxu0 0.0
        %278 = vmatpush1.msra.mxu0 0.0
        %279 = vmatprep.subr.mxu0 0.0
        %280 = vmatpush1.msra.mxu0 0.0
        %281 = vmatprep.subr.mxu0 0.0
        %282 = vmatpush1.msra.mxu0 0.0
        %283 = vmatprep.subr.mxu0 0.0
        %284 = vmatpush1.msra.mxu0 0.0
        %285 = vmatprep.subr.mxu0 0.0
        %286 = vmatpush1.msra.mxu0 0.0
        %287 = vmatprep.subr.mxu0 0.0
        %288 = vmatpush1.msra.mxu0 0.0
        %289 = vmatprep.subr.mxu0 0.0
        %290 = vmatpush1.msra.mxu0 0.0
        %291 = vmatprep.mubr.f32.mxu0 0.0
        %292 = vmatmul.mubr.f32.gmra.mrb[0].mxu0 %v225
        %v293 = vpop.f32.mrb[0].mxu0
        %v294 = vadd.f32 %v221, %v293
        %v295 = vpop.f32.mrb[0].mxu0
        %296 = vdwg.mxu0
        %v297 = vmax.f32 %v294, 0.0
        %v298 = vmin.f32 %v297, 1.0
        %vm299 = vcmask 64512
        %300 = vst.msk [vmem:[%s136] sm:$0xff] %vm299, %v298
        %s301 = sand.u32 %s71, 1
        %s302 = scalar_lea.sflag [#allocation3], %s301
        %s303 = sand.u32 %s71, 1
        %s304 = smul.addr %s303, 8
        %s305 = scalar_lea.vmem [#allocation2], %s304
        // Predicated region
        $region29: #{blindnet_forward.3} parent=27 // pred_check
          %p306 = pneg %p81
        $region30: #{blindnet_forward.3} parent=27 // pred_check_branch
          %308 = sbr.rel (%p306) target = $region32
        $region31: #{blindnet_forward.3} parent=27 // pred_region
          %s310 = ssub.s32 128, 128
          %311 = vsyncadd %s302, %s310
          %s312 = smul.addr %s16, 128
          %s313 = scalar_lea.hbm %s2, %s312
          %s315 = sshll.u32 %s305, 4
          %s316 = int_to_ptr.vmem [resolvable:$true] %s315
          %318 = dma.vmem_to_hbm [thread:$0]  %s316, 128, %s313, %s302
        $region32: #{blindnet_forward.3} parent=27 // pred_fallthru
          _
      $region28: #{blindnet_forward.3} parent=5 // pred_fallthru
        _
      %p319 = scmp.le.s32.totalorder 2, %s11
      // Predicated region
      $region33: #{blindnet_forward.3} parent=5 // pred_check
        %p320 = pneg %p319
      $region34: #{blindnet_forward.3} parent=5 // pred_check_branch
        %322 = sbr.rel (%p320) target = $region36
      $region35: #{blindnet_forward.3} parent=5 // pred_region
        %s323 = ssub.s32 %s11, 2
        // Predicated region
        $region37: #{blindnet_forward.3} parent=35 // pred_check
          %p324 = pneg %p87
        $region38: #{blindnet_forward.3} parent=35 // pred_check_branch
          %326 = sbr.rel (%p324) target = $region40
        $region39: #{blindnet_forward.3} parent=35 // pred_region
          %s327 = sand.u32 %s72, 1
          %s328 = scalar_lea.sflag [#allocation3], %s327
          %s329 = sand.u32 %s72, 1
          %s330 = smul.addr %s329, 8
          %s331 = scalar_lea.vmem [#allocation2], %s330
          %332 = dma.done %s328, 128
        $region40: #{blindnet_forward.3} parent=35 // pred_fallthru
          _
      $region36: #{blindnet_forward.3} parent=5 // pred_fallthru
        _
    $region6: #{blindnet_forward.3} parent=1 // loop_footer
      %s15 = sadd.s32 1, %s11
    $region7: #{blindnet_forward.3} parent=1 // loop_footer_branch
      %10 = sbr.rel target = $region3
    $region8: #{blindnet_forward.3} parent=1 // loop_exit
      _
    %333 = vsyncpa [#allocation3], 1
    %s334 = scalar_lea.sflag [#allocation3], 1
    %335 = vsyncpa %s334, 1

</llo_original>
